<compile_context>
chip_gen: v5e
topology: v5e:2x2
jax: 0.10.0
libtpu: 0.0.40
codegen_flags: <defaults>
</compile_context>

<pallas_src>
import functools
import math

import jax
import jax.numpy as jnp
import numpy as np
from jax.experimental import pallas as pl
from jax.experimental.pallas import tpu as pltpu

EPS = 1e-5


def _double_conv_kernel(a_ref, w1_ref, w2_ref, g1_ref, be1_ref, g2_ref, be2_ref,
                        o_ref, *, H, Cout, inv_count):
    """Fused Conv3x3+BN+ReLU (x2) on an (x, channel)-folded lane layout.

    a_ref  : (M, 3*Wp*Cin)  bf16  conv1 LHS (rows = (n, y); K order = (dy, x_in, ci))
    w1_ref : (3*Wp*Cin, WC) bf16  banded conv1 weights
    w2_ref : (3*WC, WC)     bf16  banded conv2 weights (dy-major rows)
    g*/be* : (1, WC)        f32   BN gamma / beta, pre-folded along lanes
    o_ref  : (M, WC)        f32   output (rows = (n, y); lanes = (x, co))
    """
    M, WC = o_ref.shape

    def channel_sum_lanes(v):
        # Sum over the W x-positions folded onto the lane axis (period = Cout)
        # via a log2(W) roll-tree: XLU lane rolls + VPU adds, no MXU.  Result
        # lane l holds that row's sum for channel l % Cout (already folded).
        s = v
        step = Cout
        while step < WC:
            s = s + pltpu.roll(s, shift=step, axis=1)
            step *= 2
        return s

    def bn_relu(acc, gamma, beta):
        # Train-mode BatchNorm fused to one scale/shift.  One-pass stats
        # (E[x], E[x^2]) computed in full f32 on VPU/XLU; [acc; acc*acc] are
        # stacked along sublanes so the roll-tree runs once.
        st = channel_sum_lanes(jnp.concatenate([acc, acc * acc], axis=0))
        mean = jnp.sum(st[:M], axis=0, keepdims=True) * inv_count      # (1, WC)
        msq = jnp.sum(st[M:], axis=0, keepdims=True) * inv_count       # (1, WC)
        var = msq - mean * mean
        scale = gamma * jax.lax.rsqrt(var + EPS)
        shift = beta - mean * scale
        return jnp.maximum(acc * scale + shift, 0.0)

    # ---- conv1: ONE banded matmul (K = 3*(W+2)*Cin), bf16 in / f32 acc ----
    acc1 = jnp.dot(a_ref[...], w1_ref[...], preferred_element_type=jnp.float32)
    h1f = bn_relu(acc1, g1_ref[...], be1_ref[...])                     # (M, WC) f32

    # ---- conv2: +/-1 y halo via XLU sublane rolls + per-image row masks
    #      (implicit zero pad in y), banded weights give the x pad, then ONE
    #      deep contraction with K = 3*WC ----
    row = jax.lax.broadcasted_iota(jnp.int32, (M, 1), 0)
    h1_dn = jnp.where(row % H != 0,                                    # row y <- y-1
                      pltpu.roll(h1f, shift=1, axis=0), 0.0)
    h1_up = jnp.where(row % H != H - 1,                                # row y <- y+1
                      pltpu.roll(h1f, shift=M - 1, axis=0), 0.0)
    lhs2 = jnp.concatenate([h1_dn, h1f, h1_up], axis=1).astype(jnp.bfloat16)
    acc2 = jnp.dot(lhs2, w2_ref[...], preferred_element_type=jnp.float32)

    o_ref[...] = bn_relu(acc2, g2_ref[...], be2_ref[...])


def _banded_w1(w1, W):
    """(3,3,Cin,Cout) HWIO -> (3*(W+2)*Cin, W*Cout) banded matrix, bf16."""
    Cin, Cout = w1.shape[2], w1.shape[3]
    Wp = W + 2
    xi = jnp.arange(Wp)[:, None]                  # padded input column
    xo = jnp.arange(W)[None, :]                   # output column
    dx = xi - xo                                  # tap index, valid in {0,1,2}
    valid = ((dx >= 0) & (dx <= 2)).astype(w1.dtype)
    g = w1[:, jnp.clip(dx, 0, 2)] * valid[None, :, :, None, None]   # (3,Wp,W,Cin,Cout)
    g = jnp.transpose(g, (0, 1, 3, 2, 4))                            # (3,Wp,Cin,W,Cout)
    return g.reshape(3 * Wp * Cin, W * Cout).astype(jnp.bfloat16)


def _banded_w2(w2, W):
    """(3,3,C,C) HWIO -> (3*W*C, W*C) banded matrix (implicit zero pad in x)."""
    C = w2.shape[2]
    xi = jnp.arange(W)[:, None]
    xo = jnp.arange(W)[None, :]
    dx = xi - xo + 1                              # tap index, valid in {0,1,2}
    valid = ((dx >= 0) & (dx <= 2)).astype(w2.dtype)
    g = w2[:, jnp.clip(dx, 0, 2)] * valid[None, :, :, None, None]    # (3,W,W,C,C)
    g = jnp.transpose(g, (0, 1, 3, 2, 4))                             # (3,W,C,W,C)
    return g.reshape(3 * W * C, W * C).astype(jnp.bfloat16)


@jax.jit
def double_conv(x_nchw, w1, b1, g1, be1, w2, b2, g2, be2):
    """x_nchw: (N, Cin, H, W) f32 -> (N, Cout, H, W) f32 (train-mode forward)."""
    # Conv biases cancel exactly against the batch-statistics mean subtraction of
    # the following train-mode BatchNorm, so they never reach the kernel.
    del b1, b2
    N, Cin, H, W = x_nchw.shape
    Cout = w1.shape[-1]
    Hp, Wp = H + 2, W + 2
    M, WC = N * H, W * Cout
    assert W & (W - 1) == 0, "lane roll-tree assumes W is a power of two"

    # NCHW -> NHWC, zero-pad spatially, fold (x, channel) onto the lane axis.
    xp = jnp.pad(jnp.transpose(x_nchw, (0, 2, 3, 1)).astype(jnp.float32),
                 ((0, 0), (1, 1), (1, 1), (0, 0)))
    xf = xp.reshape(N, Hp, Wp * Cin).astype(jnp.bfloat16)
    # conv1 LHS: the three dy row-windows concatenated along K (layout plumbing).
    a = jnp.concatenate(
        [xf[:, dy:dy + H, :].reshape(M, Wp * Cin) for dy in range(3)], axis=-1)

    w1t = _banded_w1(w1, W)                       # (3*Wp*Cin, WC)
    w2t = _banded_w2(w2, W)                       # (3*WC, WC)

    # BN gamma/beta folded along lanes (lane l -> channel l % Cout).
    fold = lambda v: jnp.tile(v.astype(jnp.float32), W).reshape(1, WC)

    kernel = functools.partial(_double_conv_kernel, H=H, Cout=Cout,
                               inv_count=1.0 / (N * H * W))

    out_flat = pl.pallas_call(
        kernel,
        out_shape=jax.ShapeDtypeStruct((M, WC), jnp.float32),
        in_specs=[pl.BlockSpec(memory_space=pltpu.MemorySpace.VMEM)] * 7,
        out_specs=pl.BlockSpec(memory_space=pltpu.MemorySpace.VMEM),
    )(a, w1t, w2t, fold(g1), fold(be1), fold(g2), fold(be2))

    # rows = (n, y), lanes = (x, co)  ->  NCHW
    return jnp.transpose(out_flat.reshape(N, H, W, Cout), (0, 3, 1, 2))


def ref_double_conv(x_nchw, w1, b1, g1, be1, w2, b2, g2, be2):
    """Pure-JAX f32 reference (same math as PyTorch train-mode forward, NCHW)."""
    def conv(x, w, b):
        y = jax.lax.conv_general_dilated(
            x, w, window_strides=(1, 1), padding="SAME",
            dimension_numbers=("NCHW", "HWIO", "NCHW"),
            precision=jax.lax.Precision.HIGHEST)
        return y + b[None, :, None, None]

    def bn_relu(y, g, be):
        mean = jnp.mean(y, axis=(0, 2, 3), keepdims=True)
        var = jnp.mean((y - mean) ** 2, axis=(0, 2, 3), keepdims=True)
        yn = (y - mean) * jax.lax.rsqrt(var + EPS)
        return jnp.maximum(yn * g[None, :, None, None] + be[None, :, None, None], 0.0)

    y = bn_relu(conv(x_nchw, w1, b1), g1, be1)
    return bn_relu(conv(y, w2, b2), g2, be2)


if __name__ == "__main__":
    N, Cin, Cout, H, W = 2, 4, 8, 16, 16
    key = jax.random.PRNGKey(0)
    kx, kw1, kb1, kw2, kb2 = jax.random.split(key, 5)

    # Deterministic synthetic params (PyTorch-like uniform(-1/sqrt(fan_in), ...)).
    fan1, fan2 = Cin * 9, Cout * 9
    w1 = jax.random.uniform(kw1, (3, 3, Cin, Cout), jnp.float32, -1.0, 1.0) / math.sqrt(fan1)
    b1 = jax.random.uniform(kb1, (Cout,), jnp.float32, -1.0, 1.0) / math.sqrt(fan1)
    w2 = jax.random.uniform(kw2, (3, 3, Cout, Cout), jnp.float32, -1.0, 1.0) / math.sqrt(fan2)
    b2 = jax.random.uniform(kb2, (Cout,), jnp.float32, -1.0, 1.0) / math.sqrt(fan2)
    g1 = jnp.ones((Cout,), jnp.float32)    # BN weight (PyTorch init = 1)
    be1 = jnp.zeros((Cout,), jnp.float32)  # BN bias   (PyTorch init = 0)
    g2 = jnp.ones((Cout,), jnp.float32)
    be2 = jnp.zeros((Cout,), jnp.float32)

    x = jax.random.normal(kx, (N, Cin, H, W), jnp.float32)

    out = jax.block_until_ready(double_conv(x, w1, b1, g1, be1, w2, b2, g2, be2))
    ref = ref_double_conv(x, w1, b1, g1, be1, w2, b2, g2, be2)

    # bf16 MXU operands with f32 accumulation: 2e-2 tolerance.
    np.testing.assert_allclose(np.asarray(out), np.asarray(ref), rtol=2e-2, atol=2e-2)
    print("KERNEL_OK")
</pallas_src>

<mosaic_0001>
module attributes {stable_mosaic.version = 11 : i64} {
  func.func @_double_conv_kernel(%arg0: memref<32x216xbf16, #tpu.memory_space<vmem>>, %arg1: memref<216x128xbf16, #tpu.memory_space<vmem>>, %arg2: memref<384x128xbf16, #tpu.memory_space<vmem>>, %arg3: memref<1x128xf32, #tpu.memory_space<vmem>>, %arg4: memref<1x128xf32, #tpu.memory_space<vmem>>, %arg5: memref<1x128xf32, #tpu.memory_space<vmem>>, %arg6: memref<1x128xf32, #tpu.memory_space<vmem>>, %arg7: memref<32x128xf32, #tpu.memory_space<vmem>>) attributes {dimension_semantics = [], scalar_prefetch = 0 : i64, scratch_operands = 0 : i64, tpu.core_type = #tpu.core_type<tc>} {
    %c0 = arith.constant 0 : index
    %c0_0 = arith.constant 0 : index
    %0 = vector.load %arg0[%c0, %c0_0] : memref<32x216xbf16, #tpu.memory_space<vmem>>, vector<32x216xbf16>
    %c0_1 = arith.constant 0 : index
    %c0_2 = arith.constant 0 : index
    %1 = vector.load %arg1[%c0_1, %c0_2] : memref<216x128xbf16, #tpu.memory_space<vmem>>, vector<216x128xbf16>
    %cst = arith.constant dense<0.000000e+00> : vector<32x128xf32>
    %2 = tpu.matmul %0, %1, %cst {dimension_numbers = #tpu.dot_dimension_numbers<[1], [0], [0], [1], [0, 0, 1, 1], [], []>} : vector<32x216xbf16>, vector<216x128xbf16>, vector<32x128xf32> -> vector<32x128xf32>
    %c0_3 = arith.constant 0 : index
    %c0_4 = arith.constant 0 : index
    %3 = vector.load %arg3[%c0_3, %c0_4] : memref<1x128xf32, #tpu.memory_space<vmem>>, vector<1x128xf32>
    %c0_5 = arith.constant 0 : index
    %c0_6 = arith.constant 0 : index
    %4 = vector.load %arg4[%c0_5, %c0_6] : memref<1x128xf32, #tpu.memory_space<vmem>>, vector<1x128xf32>
    %5 = arith.mulf %2, %2 : vector<32x128xf32>
    %6 = tpu.concatenate %2, %5 in 0 : vector<32x128xf32>, vector<32x128xf32> -> vector<64x128xf32>
    %c8_i32 = arith.constant 8 : i32
    %7 = tpu.dynamic_rotate %6 by %c8_i32 dim 1 : vector<64x128xf32>, i32 -> vector<64x128xf32>
    %8 = arith.addf %6, %7 : vector<64x128xf32>
    %c16_i32 = arith.constant 16 : i32
    %9 = tpu.dynamic_rotate %8 by %c16_i32 dim 1 : vector<64x128xf32>, i32 -> vector<64x128xf32>
    %10 = arith.addf %8, %9 : vector<64x128xf32>
    %c32_i32 = arith.constant 32 : i32
    %11 = tpu.dynamic_rotate %10 by %c32_i32 dim 1 : vector<64x128xf32>, i32 -> vector<64x128xf32>
    %12 = arith.addf %10, %11 : vector<64x128xf32>
    %c64_i32 = arith.constant 64 : i32
    %13 = tpu.dynamic_rotate %12 by %c64_i32 dim 1 : vector<64x128xf32>, i32 -> vector<64x128xf32>
    %14 = arith.addf %12, %13 : vector<64x128xf32>
    %15 = vector.extract_strided_slice %14 {offsets = [0, 0], sizes = [32, 128], strides = [1, 1]} : vector<64x128xf32> to vector<32x128xf32>
    %cst_7 = arith.constant dense<0.000000e+00> : vector<128xf32>
    %16 = vector.multi_reduction <add>, %15, %cst_7 [0] : vector<32x128xf32> to vector<128xf32>
    %17 = vector.shape_cast %16 : vector<128xf32> to vector<1x128xf32>
    %cst_8 = arith.constant 0.001953125 : f32
    %18 = vector.broadcast %cst_8 : f32 to vector<1x128xf32>
    %19 = arith.mulf %17, %18 : vector<1x128xf32>
    %20 = vector.extract_strided_slice %14 {offsets = [32, 0], sizes = [32, 128], strides = [1, 1]} : vector<64x128xf32> to vector<32x128xf32>
    %cst_9 = arith.constant dense<0.000000e+00> : vector<128xf32>
    %21 = vector.multi_reduction <add>, %20, %cst_9 [0] : vector<32x128xf32> to vector<128xf32>
    %22 = vector.shape_cast %21 : vector<128xf32> to vector<1x128xf32>
    %cst_10 = arith.constant 0.001953125 : f32
    %23 = vector.broadcast %cst_10 : f32 to vector<1x128xf32>
    %24 = arith.mulf %22, %23 : vector<1x128xf32>
    %25 = arith.mulf %19, %19 : vector<1x128xf32>
    %26 = arith.subf %24, %25 : vector<1x128xf32>
    %cst_11 = arith.constant 9.99999974E-6 : f32
    %27 = vector.broadcast %cst_11 : f32 to vector<1x128xf32>
    %28 = arith.addf %26, %27 : vector<1x128xf32>
    %29 = math.rsqrt %28 : vector<1x128xf32>
    %30 = arith.mulf %3, %29 : vector<1x128xf32>
    %31 = arith.mulf %19, %30 : vector<1x128xf32>
    %32 = arith.subf %4, %31 : vector<1x128xf32>
    %33 = vector.broadcast %30 : vector<1x128xf32> to vector<32x128xf32>
    %34 = arith.mulf %2, %33 : vector<32x128xf32>
    %35 = vector.broadcast %32 : vector<1x128xf32> to vector<32x128xf32>
    %36 = arith.addf %34, %35 : vector<32x128xf32>
    %cst_12 = arith.constant 0.000000e+00 : f32
    %37 = vector.broadcast %cst_12 : f32 to vector<32x128xf32>
    %38 = arith.maximumf %36, %37 : vector<32x128xf32>
    %39 = tpu.iota {dimensions = array<i32: 0>} : vector<32x1xi32>
    %c16_i32_13 = arith.constant 16 : i32
    %c0_i32 = arith.constant 0 : i32
    %40 = arith.cmpi eq, %c16_i32_13, %c0_i32 : i32
    %c1_i32 = arith.constant 1 : i32
    %41 = arith.select %40, %c1_i32, %c16_i32_13 : i32
    %42 = vector.broadcast %41 : i32 to vector<32x1xi32>
    %43 = arith.remsi %39, %42 : vector<32x1xi32>
    %c0_i32_14 = arith.constant 0 : i32
    %44 = vector.broadcast %c0_i32_14 : i32 to vector<32x1xi32>
    %45 = arith.cmpi ne, %43, %44 : vector<32x1xi32>
    %c0_i32_15 = arith.constant 0 : i32
    %46 = vector.broadcast %c0_i32_15 : i32 to vector<32x1xi32>
    %47 = arith.cmpi slt, %43, %46 : vector<32x1xi32>
    %c0_i32_16 = arith.constant 0 : i32
    %48 = arith.cmpi slt, %41, %c0_i32_16 : i32
    %49 = vector.broadcast %48 : i1 to vector<32x1xi1>
    %50 = vector.broadcast %49 : vector<32x1xi1> to vector<32x1xi1>
    %51 = arith.xori %47, %50 : vector<32x1xi1>
    %52 = arith.andi %51, %45 : vector<32x1xi1>
    %53 = vector.broadcast %41 : i32 to vector<32x1xi32>
    %54 = arith.addi %43, %53 : vector<32x1xi32>
    %55 = arith.select %52, %54, %43 : vector<32x1xi1>, vector<32x1xi32>
    %c0_i32_17 = arith.constant 0 : i32
    %56 = vector.broadcast %c0_i32_17 : i32 to vector<32x1xi32>
    %57 = arith.cmpi ne, %55, %56 : vector<32x1xi32>
    %c1_i32_18 = arith.constant 1 : i32
    %58 = tpu.dynamic_rotate %38 by %c1_i32_18 dim 0 : vector<32x128xf32>, i32 -> vector<32x128xf32>
    %cst_19 = arith.constant 0.000000e+00 : f32
    %59 = vector.shape_cast %57 : vector<32x1xi1> to vector<32x1xi1>
    %60 = vector.broadcast %59 : vector<32x1xi1> to vector<32x128xi1>
    %61 = vector.broadcast %cst_19 : f32 to vector<32x128xf32>
    %62 = arith.select %60, %58, %61 : vector<32x128xi1>, vector<32x128xf32>
    %c16_i32_20 = arith.constant 16 : i32
    %c0_i32_21 = arith.constant 0 : i32
    %63 = arith.cmpi eq, %c16_i32_20, %c0_i32_21 : i32
    %c1_i32_22 = arith.constant 1 : i32
    %64 = arith.select %63, %c1_i32_22, %c16_i32_20 : i32
    %65 = vector.broadcast %64 : i32 to vector<32x1xi32>
    %66 = arith.remsi %39, %65 : vector<32x1xi32>
    %c0_i32_23 = arith.constant 0 : i32
    %67 = vector.broadcast %c0_i32_23 : i32 to vector<32x1xi32>
    %68 = arith.cmpi ne, %66, %67 : vector<32x1xi32>
    %c0_i32_24 = arith.constant 0 : i32
    %69 = vector.broadcast %c0_i32_24 : i32 to vector<32x1xi32>
    %70 = arith.cmpi slt, %66, %69 : vector<32x1xi32>
    %c0_i32_25 = arith.constant 0 : i32
    %71 = arith.cmpi slt, %64, %c0_i32_25 : i32
    %72 = vector.broadcast %71 : i1 to vector<32x1xi1>
    %73 = vector.broadcast %72 : vector<32x1xi1> to vector<32x1xi1>
    %74 = arith.xori %70, %73 : vector<32x1xi1>
    %75 = arith.andi %74, %68 : vector<32x1xi1>
    %76 = vector.broadcast %64 : i32 to vector<32x1xi32>
    %77 = arith.addi %66, %76 : vector<32x1xi32>
    %78 = arith.select %75, %77, %66 : vector<32x1xi1>, vector<32x1xi32>
    %c15_i32 = arith.constant 15 : i32
    %79 = vector.broadcast %c15_i32 : i32 to vector<32x1xi32>
    %80 = arith.cmpi ne, %78, %79 : vector<32x1xi32>
    %c31_i32 = arith.constant 31 : i32
    %81 = tpu.dynamic_rotate %38 by %c31_i32 dim 0 : vector<32x128xf32>, i32 -> vector<32x128xf32>
    %cst_26 = arith.constant 0.000000e+00 : f32
    %82 = vector.shape_cast %80 : vector<32x1xi1> to vector<32x1xi1>
    %83 = vector.broadcast %82 : vector<32x1xi1> to vector<32x128xi1>
    %84 = vector.broadcast %cst_26 : f32 to vector<32x128xf32>
    %85 = arith.select %83, %81, %84 : vector<32x128xi1>, vector<32x128xf32>
    %86 = tpu.concatenate %62, %38, %85 in 1 : vector<32x128xf32>, vector<32x128xf32>, vector<32x128xf32> -> vector<32x384xf32>
    %87 = arith.truncf %86 : vector<32x384xf32> to vector<32x384xbf16>
    %c0_27 = arith.constant 0 : index
    %c0_28 = arith.constant 0 : index
    %88 = vector.load %arg2[%c0_27, %c0_28] : memref<384x128xbf16, #tpu.memory_space<vmem>>, vector<384x128xbf16>
    %cst_29 = arith.constant dense<0.000000e+00> : vector<32x128xf32>
    %89 = tpu.matmul %87, %88, %cst_29 {dimension_numbers = #tpu.dot_dimension_numbers<[1], [0], [0], [1], [0, 0, 1, 1], [], []>} : vector<32x384xbf16>, vector<384x128xbf16>, vector<32x128xf32> -> vector<32x128xf32>
    %c0_30 = arith.constant 0 : index
    %c0_31 = arith.constant 0 : index
    %90 = vector.load %arg5[%c0_30, %c0_31] : memref<1x128xf32, #tpu.memory_space<vmem>>, vector<1x128xf32>
    %c0_32 = arith.constant 0 : index
    %c0_33 = arith.constant 0 : index
    %91 = vector.load %arg6[%c0_32, %c0_33] : memref<1x128xf32, #tpu.memory_space<vmem>>, vector<1x128xf32>
    %92 = arith.mulf %89, %89 : vector<32x128xf32>
    %93 = tpu.concatenate %89, %92 in 0 : vector<32x128xf32>, vector<32x128xf32> -> vector<64x128xf32>
    %c8_i32_34 = arith.constant 8 : i32
    %94 = tpu.dynamic_rotate %93 by %c8_i32_34 dim 1 : vector<64x128xf32>, i32 -> vector<64x128xf32>
    %95 = arith.addf %93, %94 : vector<64x128xf32>
    %c16_i32_35 = arith.constant 16 : i32
    %96 = tpu.dynamic_rotate %95 by %c16_i32_35 dim 1 : vector<64x128xf32>, i32 -> vector<64x128xf32>
    %97 = arith.addf %95, %96 : vector<64x128xf32>
    %c32_i32_36 = arith.constant 32 : i32
    %98 = tpu.dynamic_rotate %97 by %c32_i32_36 dim 1 : vector<64x128xf32>, i32 -> vector<64x128xf32>
    %99 = arith.addf %97, %98 : vector<64x128xf32>
    %c64_i32_37 = arith.constant 64 : i32
    %100 = tpu.dynamic_rotate %99 by %c64_i32_37 dim 1 : vector<64x128xf32>, i32 -> vector<64x128xf32>
    %101 = arith.addf %99, %100 : vector<64x128xf32>
    %102 = vector.extract_strided_slice %101 {offsets = [0, 0], sizes = [32, 128], strides = [1, 1]} : vector<64x128xf32> to vector<32x128xf32>
    %cst_38 = arith.constant dense<0.000000e+00> : vector<128xf32>
    %103 = vector.multi_reduction <add>, %102, %cst_38 [0] : vector<32x128xf32> to vector<128xf32>
    %104 = vector.shape_cast %103 : vector<128xf32> to vector<1x128xf32>
    %cst_39 = arith.constant 0.001953125 : f32
    %105 = vector.broadcast %cst_39 : f32 to vector<1x128xf32>
    %106 = arith.mulf %104, %105 : vector<1x128xf32>
    %107 = vector.extract_strided_slice %101 {offsets = [32, 0], sizes = [32, 128], strides = [1, 1]} : vector<64x128xf32> to vector<32x128xf32>
    %cst_40 = arith.constant dense<0.000000e+00> : vector<128xf32>
    %108 = vector.multi_reduction <add>, %107, %cst_40 [0] : vector<32x128xf32> to vector<128xf32>
    %109 = vector.shape_cast %108 : vector<128xf32> to vector<1x128xf32>
    %cst_41 = arith.constant 0.001953125 : f32
    %110 = vector.broadcast %cst_41 : f32 to vector<1x128xf32>
    %111 = arith.mulf %109, %110 : vector<1x128xf32>
    %112 = arith.mulf %106, %106 : vector<1x128xf32>
    %113 = arith.subf %111, %112 : vector<1x128xf32>
    %cst_42 = arith.constant 9.99999974E-6 : f32
    %114 = vector.broadcast %cst_42 : f32 to vector<1x128xf32>
    %115 = arith.addf %113, %114 : vector<1x128xf32>
    %116 = math.rsqrt %115 : vector<1x128xf32>
    %117 = arith.mulf %90, %116 : vector<1x128xf32>
    %118 = arith.mulf %106, %117 : vector<1x128xf32>
    %119 = arith.subf %91, %118 : vector<1x128xf32>
    %120 = vector.broadcast %117 : vector<1x128xf32> to vector<32x128xf32>
    %121 = arith.mulf %89, %120 : vector<32x128xf32>
    %122 = vector.broadcast %119 : vector<1x128xf32> to vector<32x128xf32>
    %123 = arith.addf %121, %122 : vector<32x128xf32>
    %cst_43 = arith.constant 0.000000e+00 : f32
    %124 = vector.broadcast %cst_43 : f32 to vector<32x128xf32>
    %125 = arith.maximumf %123, %124 : vector<32x128xf32>
    %c0_44 = arith.constant 0 : index
    %c0_45 = arith.constant 0 : index
    %126 = vector.load %arg7[%c0_44, %c0_45] : memref<32x128xf32, #tpu.memory_space<vmem>>, vector<32x128xf32>
    tpu.vector_store %arg7[%c0_44, %c0_45], %125 {strides = array<i32>} : memref<32x128xf32, #tpu.memory_space<vmem>>, vector<32x128xf32>,
    return
  }
}

</mosaic_0001>

<llo_original>
// kernel: tile.23
$region0: #{tile.23}
  #allocation0 [shape = 's32[1]{0}', space=sflag, size = 0x4, scoped, tag = 'scoped memory for tile.23']
  %s0 = inlined_call_operand.vmem [shape: f32[8], index: 0, kind: input, shape index: {}]
  %s1 = inlined_call_operand.vmem [shape: f32[16,8], index: 1, kind: output, shape index: {}]
  // Predicated region
  $region2: #{tile.23} parent=0 // pred_check
    _
  $region3: #{tile.23} parent=0 // pred_check_branch
    %3 = sbr.rel (0) target = $region5
  $region4: #{tile.23} parent=0 // pred_region
    _
  $region5: #{tile.23} parent=0 // pred_fallthru
    _
  %v4 = vld [vmem:[%s0] ss:$0 sm:$0xff]
  %5 = vst [vmem:[%s1] sm:$0xff] %v4
  %s6 = scalar_lea.vmem %s1, 8
  %7 = vst [vmem:[%s6] sm:$0xff] %v4

// kernel: tile.24
$region0: #{tile.24}
  %s0 = inlined_call_operand.vmem [shape: f32[16,8], index: 0, kind: input, shape index: {}]
  %s1 = inlined_call_operand.vmem [shape: f32[1,128], index: 1, kind: output, shape index: {}]
  $region1: #{tile.24} parent=0
    #allocation0 [shape = 'u8[4096]{0}', space=vmem, size = 0x1000, scoped, tag = 'scoped mem for output reshape']
    %v2 = vld [vmem:[%s0] sm:$0x1]
    %vm3 = vcmask 64512
    %4 = vst.msk [vmem:[#allocation0] sm:$0x1] %vm3, %v2
    %s5 = scalar_lea.vmem %s0, 15
    %v6 = vld [vmem:[%s5] sm:$0x1]
    %7 = vrot.lane.b32.xlu0 %v6, 120
    %v8 = vpop.permute.xlu0 %7
    %vm9 = vcmask 1048512
    %10 = vst.msk [vmem:[#allocation0] sm:$0x1] %vm9, %v8
    %s11 = scalar_lea.vmem %s0, 14
    %v12 = vld [vmem:[%s11] sm:$0x1]
    %13 = vrot.lane.b32.xlu0 %v12, 112
    %v14 = vpop.permute.xlu0 %13
    %vm15 = vcmask 982912
    %16 = vst.msk [vmem:[#allocation0] sm:$0x1] %vm15, %v14
    %s17 = scalar_lea.vmem %s0, 13
    %v18 = vld [vmem:[%s17] sm:$0x1]
    %19 = vrot.lane.b32.xlu0 %v18, 104
    %v20 = vpop.permute.xlu0 %19
    %vm21 = vcmask 917312
    %22 = vst.msk [vmem:[#allocation0] sm:$0x1] %vm21, %v20
    %s23 = scalar_lea.vmem %s0, 12
    %v24 = vld [vmem:[%s23] sm:$0x1]
    %25 = vrot.lane.b32.xlu0 %v24, 96
    %v26 = vpop.permute.xlu0 %25
    %vm27 = vcmask 851712
    %28 = vst.msk [vmem:[#allocation0] sm:$0x1] %vm27, %v26
    %s29 = scalar_lea.vmem %s0, 11
    %v30 = vld [vmem:[%s29] sm:$0x1]
    %31 = vrot.lane.b32.xlu0 %v30, 88
    %v32 = vpop.permute.xlu0 %31
    %vm33 = vcmask 786112
    %34 = vst.msk [vmem:[#allocation0] sm:$0x1] %vm33, %v32
    %s35 = scalar_lea.vmem %s0, 10
    %v36 = vld [vmem:[%s35] sm:$0x1]
    %37 = vrot.lane.b32.xlu0 %v36, 80
    %v38 = vpop.permute.xlu0 %37
    %vm39 = vcmask 720512
    %40 = vst.msk [vmem:[#allocation0] sm:$0x1] %vm39, %v38
    %s41 = scalar_lea.vmem %s0, 9
    %v42 = vld [vmem:[%s41] sm:$0x1]
    %43 = vrot.lane.b32.xlu0 %v42, 72
    %v44 = vpop.permute.xlu0 %43
    %vm45 = vcmask 654912
    %46 = vst.msk [vmem:[#allocation0] sm:$0x1] %vm45, %v44
    %s47 = scalar_lea.vmem %s0, 8
    %v48 = vld [vmem:[%s47] sm:$0x1]
    %49 = vrot.lane.b32.xlu0 %v48, 64
    %v50 = vpop.permute.xlu0 %49
    %vm51 = vcmask 589312
    %52 = vst.msk [vmem:[#allocation0] sm:$0x1] %vm51, %v50
    %s53 = scalar_lea.vmem %s0, 7
    %v54 = vld [vmem:[%s53] sm:$0x1]
    %55 = vrot.lane.b32.xlu0 %v54, 56
    %v56 = vpop.permute.xlu0 %55
    %vm57 = vcmask 523712
    %58 = vst.msk [vmem:[#allocation0] sm:$0x1] %vm57, %v56
    %s59 = scalar_lea.vmem %s0, 6
    %v60 = vld [vmem:[%s59] sm:$0x1]
    %61 = vrot.lane.b32.xlu0 %v60, 48
    %v62 = vpop.permute.xlu0 %61
    %vm63 = vcmask 458112
    %64 = vst.msk [vmem:[#allocation0] sm:$0x1] %vm63, %v62
    %s65 = scalar_lea.vmem %s0, 5
    %v66 = vld [vmem:[%s65] sm:$0x1]
    %67 = vrot.lane.b32.xlu0 %v66, 40
    %v68 = vpop.permute.xlu0 %67
    %vm69 = vcmask 392512
    %70 = vst.msk [vmem:[#allocation0] sm:$0x1] %vm69, %v68
    %s71 = scalar_lea.vmem %s0, 4
    %v72 = vld [vmem:[%s71] sm:$0x1]
    %73 = vrot.lane.b32.xlu0 %v72, 32
    %v74 = vpop.permute.xlu0 %73
    %vm75 = vcmask 326912
    %76 = vst.msk [vmem:[#allocation0] sm:$0x1] %vm75, %v74
    %s77 = scalar_lea.vmem %s0, 3
    %v78 = vld [vmem:[%s77] sm:$0x1]
    %79 = vrot.lane.b32.xlu0 %v78, 24
    %v80 = vpop.permute.xlu0 %79
    %vm81 = vcmask 261312
    %82 = vst.msk [vmem:[#allocation0] sm:$0x1] %vm81, %v80
    %s83 = scalar_lea.vmem %s0, 2
    %v84 = vld [vmem:[%s83] sm:$0x1]
    %85 = vrot.lane.b32.xlu0 %v84, 16
    %v86 = vpop.permute.xlu0 %85
    %vm87 = vcmask 195712
    %88 = vst.msk [vmem:[#allocation0] sm:$0x1] %vm87, %v86
    %s89 = scalar_lea.vmem %s0, 1
    %v90 = vld [vmem:[%s89] sm:$0x1]
    %91 = vrot.lane.b32.xlu0 %v90, 8
    %v92 = vpop.permute.xlu0 %91
    %vm93 = vcmask 130112
    %94 = vst.msk [vmem:[#allocation0] sm:$0x1] %vm93, %v92
    %s96 = ssub.s32 2, 1
    %v97 = vld [vmem:[#allocation0] sm:%s96]
    %s99 = ssub.s32 2, 1
    %100 = vst [vmem:[%s1] sm:%s99] %v97

// kernel: double_conv.1
$region0: #{double_conv.1}
  #allocation0 [shape = 'u32[]', space=smem, size = 0x4, offset = 0x4, fixed_abs, tag = 'smem constant byte address 0x4 - core index']
  #allocation1 [shape = 'u32[72,128]{1,0:T(1,128)}', space=vmem, size = 0x9000, scoped, tag = 'internal scratch']
  %s0 = inlined_call_operand.vmem [shape: bf16[32,216], index: 0, kind: input, shape index: {}]
  %s1 = inlined_call_operand.vmem [shape: bf16[216,128], index: 1, kind: input, shape index: {}]
  %s2 = inlined_call_operand.vmem [shape: bf16[384,128], index: 2, kind: input, shape index: {}]
  %s3 = inlined_call_operand.vmem [shape: f32[1,128], index: 3, kind: input, shape index: {}]
  %s4 = inlined_call_operand.vmem [shape: f32[1,128], index: 4, kind: input, shape index: {}]
  %s5 = inlined_call_operand.vmem [shape: f32[1,128], index: 5, kind: input, shape index: {}]
  %s6 = inlined_call_operand.vmem [shape: f32[1,128], index: 6, kind: input, shape index: {}]
  %s7 = inlined_call_operand.vmem [shape: f32[32,128], index: 7, kind: output, shape index: {}]
  %s8 = sld [smem:[#allocation0]]
  $region38: #{double_conv.1} parent=0
    _
  %s10 = ssub.s32 1, %s8
  %s11 = scalar_select 0, %s10, %s8
  // Predicated region
  $region2: #{double_conv.1} parent=0 // pred_check
    _
  $region3: #{double_conv.1} parent=0 // pred_check_branch
    %13 = sbr.rel (0) target = $region5
  $region4: #{double_conv.1} parent=0 // pred_region
    _
  $region5: #{double_conv.1} parent=0 // pred_fallthru
    _
  // Predicated region
  $region6: #{double_conv.1} parent=0 // pred_check
    _
  $region7: #{double_conv.1} parent=0 // pred_check_branch
    %15 = sbr.rel (0) target = $region9
  $region8: #{double_conv.1} parent=0 // pred_region
    _
  $region9: #{double_conv.1} parent=0 // pred_fallthru
    _
  // Predicated region
  $region10: #{double_conv.1} parent=0 // pred_check
    _
  $region11: #{double_conv.1} parent=0 // pred_check_branch
    %17 = sbr.rel (0) target = $region13
  $region12: #{double_conv.1} parent=0 // pred_region
    _
  $region13: #{double_conv.1} parent=0 // pred_fallthru
    _
  // Predicated region
  $region14: #{double_conv.1} parent=0 // pred_check
    _
  $region15: #{double_conv.1} parent=0 // pred_check_branch
    %19 = sbr.rel (0) target = $region17
  $region16: #{double_conv.1} parent=0 // pred_region
    _
  $region17: #{double_conv.1} parent=0 // pred_fallthru
    _
  // Predicated region
  $region18: #{double_conv.1} parent=0 // pred_check
    _
  $region19: #{double_conv.1} parent=0 // pred_check_branch
    %21 = sbr.rel (0) target = $region21
  $region20: #{double_conv.1} parent=0 // pred_region
    _
  $region21: #{double_conv.1} parent=0 // pred_fallthru
    _
  // Predicated region
  $region22: #{double_conv.1} parent=0 // pred_check
    _
  $region23: #{double_conv.1} parent=0 // pred_check_branch
    %23 = sbr.rel (0) target = $region25
  $region24: #{double_conv.1} parent=0 // pred_region
    _
  $region25: #{double_conv.1} parent=0 // pred_fallthru
    _
  // Predicated region
  $region26: #{double_conv.1} parent=0 // pred_check
    _
  $region27: #{double_conv.1} parent=0 // pred_check_branch
    %25 = sbr.rel (0) target = $region29
  $region28: #{double_conv.1} parent=0 // pred_region
    _
  $region29: #{double_conv.1} parent=0 // pred_fallthru
    _
  %v27 = vld [vmem:[%s0] sm:$0xff]
  %v28 = vld [vmem:[%s0 + $0x8] sm:$0xff]
  %v29 = vld [vmem:[%s0 + $0x10] sm:$0xff]
  %v30 = vld [vmem:[%s0 + $0x18] sm:$0xff]
  %v31 = vld [vmem:[%s1] sm:$0xf]
  %v32 = vld [vmem:[%s1 + $0x4] sm:$0xf]
  %v33 = vld [vmem:[%s1 + $0x8] sm:$0xf]
  %v34 = vld [vmem:[%s1 + $0xc] sm:$0xf]
  %v35 = vld [vmem:[%s1 + $0x10] sm:$0xf]
  %v36 = vld [vmem:[%s1 + $0x14] sm:$0xf]
  %v37 = vld [vmem:[%s1 + $0x18] sm:$0xf]
  %v38 = vld [vmem:[%s1 + $0x1c] sm:$0xf]
  %v39 = vld [vmem:[%s1 + $0x20] sm:$0xf]
  %v40 = vld [vmem:[%s1 + $0x24] sm:$0xf]
  %v41 = vld [vmem:[%s1 + $0x28] sm:$0xf]
  %v42 = vld [vmem:[%s1 + $0x2c] sm:$0xf]
  %v43 = vld [vmem:[%s1 + $0x30] sm:$0xf]
  %v44 = vld [vmem:[%s1 + $0x34] sm:$0xf]
  %v45 = vld [vmem:[%s1 + $0x38] sm:$0xf]
  %v46 = vld [vmem:[%s1 + $0x3c] sm:$0xf]
  %v47 = vld [vmem:[%s1 + $0x40] sm:$0xf]
  %v48 = vld [vmem:[%s1 + $0x44] sm:$0xf]
  %v49 = vld [vmem:[%s1 + $0x48] sm:$0xf]
  %v50 = vld [vmem:[%s1 + $0x4c] sm:$0xf]
  %v51 = vld [vmem:[%s1 + $0x50] sm:$0xf]
  %v52 = vld [vmem:[%s1 + $0x54] sm:$0xf]
  %v53 = vld [vmem:[%s1 + $0x58] sm:$0xf]
  %v54 = vld [vmem:[%s1 + $0x5c] sm:$0xf]
  %v55 = vld [vmem:[%s1 + $0x60] sm:$0xf]
  %v56 = vld [vmem:[%s1 + $0x64] sm:$0xf]
  %v57 = vld [vmem:[%s1 + $0x68] sm:$0xf]
  %v62 = vunpack.c.l.b16 %v27
  %v63 = vunpack.c.h.b16 %v27
  %v64 = vunpack.c.l.b16 %v28
  %v65 = vunpack.c.h.b16 %v28
  %v66 = vunpack.c.l.b16 %v29
  %v67 = vunpack.c.h.b16 %v29
  %v68 = vunpack.c.l.b16 %v30
  %v69 = vunpack.c.h.b16 %v30
  %v70 = vpack.c.b16 %v64, %v62
  %v71 = vpack.c.b16 %v65, %v63
  %v72 = vpack.c.b16 %v68, %v66
  %v73 = vpack.c.b16 %v69, %v67
  %v103 = vunpack.c.l.b16 %v31
  %v104 = vunpack.c.l.b16 %v32
  %v105 = vunpack.c.l.b16 %v33
  %v106 = vunpack.c.l.b16 %v34
  %v107 = vunpack.c.l.b16 %v35
  %v108 = vunpack.c.l.b16 %v36
  %v109 = vunpack.c.l.b16 %v37
  %v110 = vunpack.c.l.b16 %v38
  %v111 = vunpack.c.l.b16 %v39
  %v112 = vunpack.c.l.b16 %v40
  %v113 = vunpack.c.l.b16 %v41
  %v114 = vunpack.c.l.b16 %v42
  %v115 = vunpack.c.l.b16 %v43
  %v116 = vunpack.c.l.b16 %v44
  %v117 = vunpack.c.l.b16 %v45
  %v118 = vunpack.c.l.b16 %v46
  %v119 = vunpack.c.l.b16 %v47
  %v120 = vunpack.c.l.b16 %v48
  %v121 = vunpack.c.l.b16 %v49
  %v122 = vunpack.c.l.b16 %v50
  %v123 = vunpack.c.l.b16 %v51
  %v124 = vunpack.c.l.b16 %v52
  %v125 = vunpack.c.l.b16 %v53
  %v126 = vunpack.c.l.b16 %v54
  %v127 = vunpack.c.l.b16 %v55
  %v128 = vunpack.c.l.b16 %v56
  %v129 = vunpack.c.l.b16 %v57
  %v130 = vpack.c.b16 %v104, %v103
  %v131 = vpack.c.b16 %v106, %v105
  %v132 = vpack.c.b16 %v108, %v107
  %v133 = vpack.c.b16 %v110, %v109
  %v134 = vpack.c.b16 %v112, %v111
  %v135 = vpack.c.b16 %v114, %v113
  %v136 = vpack.c.b16 %v116, %v115
  %v137 = vpack.c.b16 %v118, %v117
  %v138 = vpack.c.b16 %v120, %v119
  %v139 = vpack.c.b16 %v122, %v121
  %v140 = vpack.c.b16 %v124, %v123
  %v141 = vpack.c.b16 %v126, %v125
  %v142 = vpack.c.b16 %v128, %v127
  %v143 = vpack.c.b16 %v129, %v129
  %vm157 = vcmask 719872
  %v159 = vsel %vm157, %v71, 0
  %v162 = vsel %vm157, %v73, 0
  %vm164 = vcmask 1043456
  %v166 = vsel %vm164, %v143, 0
  %168 = vmatpush.bf16.msra.mxu0 %v137
  %169 = vmatpush.bf16.msra.mxu0 %v136
  %170 = vmatpush.bf16.msra.mxu0 %v135
  %171 = vmatpush.bf16.msra.mxu0 %v134
  %172 = vmatpush.bf16.msra.mxu0 %v133
  %173 = vmatpush.bf16.msra.mxu0 %v132
  %174 = vmatpush.bf16.msra.mxu0 %v131
  %175 = vmatpush.bf16.msra.mxu0 %v130
  %176 = vmatmul.bf16.gmra.mxu0 %v70
  %v177 = vpop.f32.mrf.mxu0
  %v178 = vadd.f32 0.0, %v177
  %v179 = vpop.f32.mrf.mxu0
  %v180 = vadd.f32 0.0, %v179
  %181 = vmatmul.bf16.gmra.mxu0 %v72
  %v182 = vpop.f32.mrf.mxu0
  %v183 = vadd.f32 0.0, %v182
  %v184 = vpop.f32.mrf.mxu0
  %v185 = vadd.f32 0.0, %v184
  %186 = vdwg.mxu0
  %187 = vmatpush.bf16.msra.mxu0 0
  %188 = vmatpush.bf16.msra.mxu0 0
  %189 = vmatpush.bf16.msra.mxu0 %v166
  %190 = vmatpush.bf16.msra.mxu0 %v142
  %191 = vmatpush.bf16.msra.mxu0 %v141
  %192 = vmatpush.bf16.msra.mxu0 %v140
  %193 = vmatpush.bf16.msra.mxu0 %v139
  %194 = vmatpush.bf16.msra.mxu0 %v138
  %195 = vmatmul.bf16.gmra.mxu0 %v159
  %v196 = vpop.f32.mrf.mxu0
  %v197 = vadd.f32 %v178, %v196
  %v198 = vpop.f32.mrf.mxu0
  %v199 = vadd.f32 %v180, %v198
  %200 = vmatmul.bf16.gmra.mxu0 %v162
  %v201 = vpop.f32.mrf.mxu0
  %v202 = vadd.f32 %v183, %v201
  %v203 = vpop.f32.mrf.mxu0
  %v204 = vadd.f32 %v185, %v203
  %205 = vdwg.mxu0
  %v206 = vld [vmem:[%s3] sm:$0x1]
  %v207 = vld [vmem:[%s4] sm:$0x1]
  %v208 = vmul.f32 %v197, %v197
  %v209 = vmul.f32 %v199, %v199
  %v210 = vmul.f32 %v202, %v202
  %v211 = vmul.f32 %v204, %v204
  %212 = vrot.lane.b32.xlu0 %v197, 8
  %v213 = vpop.permute.xlu0 %212
  %214 = vrot.lane.b32.xlu0 %v199, 8
  %v215 = vpop.permute.xlu0 %214
  %216 = vrot.lane.b32.xlu0 %v202, 8
  %v217 = vpop.permute.xlu0 %216
  %218 = vrot.lane.b32.xlu0 %v204, 8
  %v219 = vpop.permute.xlu0 %218
  %220 = vrot.lane.b32.xlu0 %v208, 8
  %v221 = vpop.permute.xlu0 %220
  %222 = vrot.lane.b32.xlu0 %v209, 8
  %v223 = vpop.permute.xlu0 %222
  %224 = vrot.lane.b32.xlu0 %v210, 8
  %v225 = vpop.permute.xlu0 %224
  %226 = vrot.lane.b32.xlu0 %v211, 8
  %v227 = vpop.permute.xlu0 %226
  %v228 = vadd.f32 %v197, %v213
  %v229 = vadd.f32 %v199, %v215
  %v230 = vadd.f32 %v202, %v217
  %v231 = vadd.f32 %v204, %v219
  %v232 = vadd.f32 %v208, %v221
  %v233 = vadd.f32 %v209, %v223
  %v234 = vadd.f32 %v210, %v225
  %v235 = vadd.f32 %v211, %v227
  %236 = vrot.lane.b32.xlu0 %v228, 16
  %v237 = vpop.permute.xlu0 %236
  %238 = vrot.lane.b32.xlu0 %v229, 16
  %v239 = vpop.permute.xlu0 %238
  %240 = vrot.lane.b32.xlu0 %v230, 16
  %v241 = vpop.permute.xlu0 %240
  %242 = vrot.lane.b32.xlu0 %v231, 16
  %v243 = vpop.permute.xlu0 %242
  %244 = vrot.lane.b32.xlu0 %v232, 16
  %v245 = vpop.permute.xlu0 %244
  %246 = vrot.lane.b32.xlu0 %v233, 16
  %v247 = vpop.permute.xlu0 %246
  %248 = vrot.lane.b32.xlu0 %v234, 16
  %v249 = vpop.permute.xlu0 %248
  %250 = vrot.lane.b32.xlu0 %v235, 16
  %v251 = vpop.permute.xlu0 %250
  %v252 = vadd.f32 %v228, %v237
  %v253 = vadd.f32 %v229, %v239
  %v254 = vadd.f32 %v230, %v241
  %v255 = vadd.f32 %v231, %v243
  %v256 = vadd.f32 %v232, %v245
  %v257 = vadd.f32 %v233, %v247
  %v258 = vadd.f32 %v234, %v249
  %v259 = vadd.f32 %v235, %v251
  %260 = vrot.lane.b32.xlu0 %v252, 32
  %v261 = vpop.permute.xlu0 %260
  %262 = vrot.lane.b32.xlu0 %v253, 32
  %v263 = vpop.permute.xlu0 %262
  %264 = vrot.lane.b32.xlu0 %v254, 32
  %v265 = vpop.permute.xlu0 %264
  %266 = vrot.lane.b32.xlu0 %v255, 32
  %v267 = vpop.permute.xlu0 %266
  %268 = vrot.lane.b32.xlu0 %v256, 32
  %v269 = vpop.permute.xlu0 %268
  %270 = vrot.lane.b32.xlu0 %v257, 32
  %v271 = vpop.permute.xlu0 %270
  %272 = vrot.lane.b32.xlu0 %v258, 32
  %v273 = vpop.permute.xlu0 %272
  %274 = vrot.lane.b32.xlu0 %v259, 32
  %v275 = vpop.permute.xlu0 %274
  %v276 = vadd.f32 %v252, %v261
  %v277 = vadd.f32 %v253, %v263
  %v278 = vadd.f32 %v254, %v265
  %v279 = vadd.f32 %v255, %v267
  %v280 = vadd.f32 %v256, %v269
  %v281 = vadd.f32 %v257, %v271
  %v282 = vadd.f32 %v258, %v273
  %v283 = vadd.f32 %v259, %v275
  %284 = vrot.lane.b32.xlu0 %v276, 64
  %v285 = vpop.permute.xlu0 %284
  %286 = vrot.lane.b32.xlu0 %v277, 64
  %v287 = vpop.permute.xlu0 %286
  %288 = vrot.lane.b32.xlu0 %v278, 64
  %v289 = vpop.permute.xlu0 %288
  %290 = vrot.lane.b32.xlu0 %v279, 64
  %v291 = vpop.permute.xlu0 %290
  %292 = vrot.lane.b32.xlu0 %v280, 64
  %v293 = vpop.permute.xlu0 %292
  %294 = vrot.lane.b32.xlu0 %v281, 64
  %v295 = vpop.permute.xlu0 %294
  %296 = vrot.lane.b32.xlu0 %v282, 64
  %v297 = vpop.permute.xlu0 %296
  %298 = vrot.lane.b32.xlu0 %v283, 64
  %v299 = vpop.permute.xlu0 %298
  %v300 = vadd.f32 %v276, %v285
  %v301 = vadd.f32 %v277, %v287
  %v302 = vadd.f32 %v278, %v289
  %v303 = vadd.f32 %v279, %v291
  %v304 = vadd.f32 %v280, %v293
  %v305 = vadd.f32 %v281, %v295
  %v306 = vadd.f32 %v282, %v297
  %v307 = vadd.f32 %v283, %v299
  %v308 = vadd.f32 %v300, %v301
  %v309 = vadd.f32 %v308, %v302
  %v310 = vadd.f32 %v309, %v303
  %v311 = vrot.slane %v310, 4
  %v312 = vadd.f32 %v310, %v311
  %v313 = vrot.slane %v312, 2
  %v314 = vadd.f32 %v312, %v313
  %v315 = vrot.slane %v314, 1
  %v316 = vadd.f32 %v314, %v315
  %v317 = vmul.f32 %v316, 0.001953125
  %v318 = vadd.f32 %v304, %v305
  %v319 = vadd.f32 %v318, %v306
  %v320 = vadd.f32 %v319, %v307
  %v321 = vrot.slane %v320, 4
  %v322 = vadd.f32 %v320, %v321
  %v323 = vrot.slane %v322, 2
  %v324 = vadd.f32 %v322, %v323
  %v325 = vrot.slane %v324, 1
  %v326 = vadd.f32 %v324, %v325
  %v327 = vmul.f32 %v326, 0.001953125
  %v328 = vmul.f32 %v317, %v317
  %v329 = vsub.f32 %v327, %v328
  %v330 = vadd.f32 %v329, 1e-05
  %v331 = vrsqrt.pop %v330
  %v332 = vmul.f32 %v331, %v330
  %v333 = vmul.f32 %v332, %v331
  %v334 = vmul.f32 0.5, %v333
  %v335 = vsub.f32 1.5, %v334
  %v336 = vmul.f32 %v331, %v335
  %vm337 = vweird.f32 %v330
  %vm338 = vweird.f32 %v331
  %vm339 = vmor %vm337, %vm338
  %v340 = vsel %vm339, %v331, %v336
  %v341 = vmul.f32 %v206, %v340
  %v342 = vmul.f32 %v317, %v341
  %v343 = vsub.f32 %v207, %v342
  %v345 = vperm.slane %v341, 0
  %v347 = vmul.f32 %v197, %v345
  %v348 = vmul.f32 %v199, %v345
  %v349 = vmul.f32 %v202, %v345
  %v350 = vmul.f32 %v204, %v345
  %v352 = vperm.slane %v343, 0
  %v354 = vadd.f32 %v347, %v352
  %v355 = vadd.f32 %v348, %v352
  %v356 = vadd.f32 %v349, %v352
  %v357 = vadd.f32 %v350, %v352
  %v358 = vmax.f32 %v354, 0.0
  %v359 = vmax.f32 %v355, 0.0
  %v360 = vmax.f32 %v356, 0.0
  %v361 = vmax.f32 %v357, 0.0
  %v362 = vlaneseq
  %v363 = vshrl.u32 %v362, 7
  %v364 = vadd.s32 %v363, 8
  %v365 = vadd.s32 %v363, 16
  %v366 = vadd.s32 %v363, 24
  %vm367 = vcmp.lt.s32.totalorder %v363, 0
  %v368 = vsub.s32 0, %v363
  %v369 = vsel %vm367, %v368, %v363
  %v370 = vshrl.u32 %v369, 4
  %v371 = vand.u32 %v369, 15
  %v372 = vsub.s32 0, %v371
  %v373 = vsel %vm367, %v372, %v371
  %vm374 = vcmp.lt.s32.totalorder %v364, 0
  %v375 = vsub.s32 0, %v364
  %v376 = vsel %vm374, %v375, %v364
  %v377 = vshrl.u32 %v376, 4
  %v378 = vand.u32 %v376, 15
  %v379 = vsub.s32 0, %v378
  %v380 = vsel %vm374, %v379, %v378
  %vm381 = vcmp.lt.s32.totalorder %v365, 0
  %v382 = vsub.s32 0, %v365
  %v383 = vsel %vm381, %v382, %v365
  %v384 = vshrl.u32 %v383, 4
  %v385 = vand.u32 %v383, 15
  %v386 = vsub.s32 0, %v385
  %v387 = vsel %vm381, %v386, %v385
  %vm388 = vcmp.lt.s32.totalorder %v366, 0
  %v389 = vsub.s32 0, %v366
  %v390 = vsel %vm388, %v389, %v366
  %v391 = vshrl.u32 %v390, 4
  %v392 = vand.u32 %v390, 15
  %v393 = vsub.s32 0, %v392
  %v394 = vsel %vm388, %v393, %v392
  %vm395 = vcmp.ne.s32.totalorder %v373, 0
  %vm396 = vcmp.ne.s32.totalorder %v380, 0
  %vm397 = vcmp.ne.s32.totalorder %v387, 0
  %vm398 = vcmp.ne.s32.totalorder %v394, 0
  %vm399 = vcmp.lt.s32.totalorder %v373, 0
  %vm400 = vcmp.lt.s32.totalorder %v380, 0
  %vm401 = vcmp.lt.s32.totalorder %v387, 0
  %vm402 = vcmp.lt.s32.totalorder %v394, 0
  %vm403 = vmand %vm399, %vm395
  %vm404 = vmand %vm400, %vm396
  %vm405 = vmand %vm401, %vm397
  %vm406 = vmand %vm402, %vm398
  %v407 = vadd.s32 %v373, 16
  %v408 = vadd.s32 %v380, 16
  %v409 = vadd.s32 %v387, 16
  %v410 = vadd.s32 %v394, 16
  %v411 = vsel %vm403, %v407, %v373
  %v412 = vsel %vm404, %v408, %v380
  %v413 = vsel %vm405, %v409, %v387
  %v414 = vsel %vm406, %v410, %v394
  %vm415 = vcmp.ne.s32.totalorder %v411, 0
  %vm416 = vcmp.ne.s32.totalorder %v412, 0
  %vm417 = vcmp.ne.s32.totalorder %v413, 0
  %vm418 = vcmp.ne.s32.totalorder %v414, 0
  %v419 = vrot.slane %v358, 7
  %v420 = vrot.slane %v359, 7
  %v421 = vrot.slane %v360, 7
  %v422 = vrot.slane %v361, 7
  %vm423 = vcmp.lt.s32.totalorder %v363, 1
  %v424 = vsel %vm423, %v421, %v422
  %v425 = vsel %vm423, %v420, %v421
  %v426 = vsel %vm423, %v419, %v420
  %v427 = vsel %vm423, %v422, %v419
  %v428 = vsel %vm415, 1, 0
  %v429 = vsel %vm416, 1, 0
  %v430 = vsel %vm417, 1, 0
  %v431 = vsel %vm418, 1, 0
  %vm432 = vcmp.eq.s32.totalorder %v428, 1
  %vm433 = vcmp.eq.s32.totalorder %v429, 1
  %vm434 = vcmp.eq.s32.totalorder %v430, 1
  %vm435 = vcmp.eq.s32.totalorder %v431, 1
  %v436 = vsel %vm432, %v427, 0.0
  %v437 = vsel %vm433, %v426, 0.0
  %v438 = vsel %vm434, %v425, 0.0
  %v439 = vsel %vm435, %v424, 0.0
  %vm440 = vcmp.ne.s32.totalorder %v411, 15
  %vm441 = vcmp.ne.s32.totalorder %v412, 15
  %vm442 = vcmp.ne.s32.totalorder %v413, 15
  %vm443 = vcmp.ne.s32.totalorder %v414, 15
  %v444 = vrot.slane %v358, 1
  %v445 = vrot.slane %v359, 1
  %v446 = vrot.slane %v360, 1
  %v447 = vrot.slane %v361, 1
  %vm448 = vcmp.lt.s32.totalorder %v363, 7
  %v449 = vsel %vm448, %v446, %v447
  %v450 = vsel %vm448, %v445, %v446
  %v451 = vsel %vm448, %v444, %v445
  %v452 = vsel %vm448, %v447, %v444
  %v453 = vsel %vm440, 1, 0
  %v454 = vsel %vm441, 1, 0
  %v455 = vsel %vm442, 1, 0
  %v456 = vsel %vm443, 1, 0
  %vm457 = vcmp.eq.s32.totalorder %v453, 1
  %vm458 = vcmp.eq.s32.totalorder %v454, 1
  %vm459 = vcmp.eq.s32.totalorder %v455, 1
  %vm460 = vcmp.eq.s32.totalorder %v456, 1
  %v461 = vsel %vm457, %v451, 0.0
  %v462 = vsel %vm458, %v450, 0.0
  %v463 = vsel %vm459, %v449, 0.0
  %v464 = vsel %vm460, %v452, 0.0
  %v465 = vpack.c.bf16 %v437, %v436
  %v466 = vpack.c.bf16 %v359, %v358
  %v467 = vpack.c.bf16 %v462, %v461
  %v468 = vpack.c.bf16 %v439, %v438
  %v469 = vpack.c.bf16 %v361, %v360
  %v470 = vpack.c.bf16 %v464, %v463
  %v471 = vld [vmem:[%s2] sm:$0xf]
  %v472 = vld [vmem:[%s2 + $0x4] sm:$0xf]
  %v473 = vld [vmem:[%s2 + $0x8] sm:$0xf]
  %v474 = vld [vmem:[%s2 + $0xc] sm:$0xf]
  %v475 = vld [vmem:[%s2 + $0x10] sm:$0xf]
  %v476 = vld [vmem:[%s2 + $0x14] sm:$0xf]
  %v477 = vld [vmem:[%s2 + $0x18] sm:$0xf]
  %v478 = vld [vmem:[%s2 + $0x1c] sm:$0xf]
  %v479 = vld [vmem:[%s2 + $0x20] sm:$0xf]
  %v480 = vld [vmem:[%s2 + $0x24] sm:$0xf]
  %v481 = vld [vmem:[%s2 + $0x28] sm:$0xf]
  %v482 = vld [vmem:[%s2 + $0x2c] sm:$0xf]
  %v483 = vld [vmem:[%s2 + $0x30] sm:$0xf]
  %v484 = vld [vmem:[%s2 + $0x34] sm:$0xf]
  %v485 = vld [vmem:[%s2 + $0x38] sm:$0xf]
  %v486 = vld [vmem:[%s2 + $0x3c] sm:$0xf]
  %v487 = vld [vmem:[%s2 + $0x40] sm:$0xf]
  %v488 = vld [vmem:[%s2 + $0x44] sm:$0xf]
  %v489 = vld [vmem:[%s2 + $0x48] sm:$0xf]
  %v490 = vld [vmem:[%s2 + $0x4c] sm:$0xf]
  %v491 = vld [vmem:[%s2 + $0x50] sm:$0xf]
  %v492 = vld [vmem:[%s2 + $0x54] sm:$0xf]
  %v493 = vld [vmem:[%s2 + $0x58] sm:$0xf]
  %v494 = vld [vmem:[%s2 + $0x5c] sm:$0xf]
  %v495 = vld [vmem:[%s2 + $0x60] sm:$0xf]
  %v496 = vld [vmem:[%s2 + $0x64] sm:$0xf]
  %v497 = vld [vmem:[%s2 + $0x68] sm:$0xf]
  %v498 = vld [vmem:[%s2 + $0x6c] sm:$0xf]
  %v499 = vld [vmem:[%s2 + $0x70] sm:$0xf]
  %v500 = vld [vmem:[%s2 + $0x74] sm:$0xf]
  %v501 = vld [vmem:[%s2 + $0x78] sm:$0xf]
  %v502 = vld [vmem:[%s2 + $0x7c] sm:$0xf]
  %v503 = vld [vmem:[%s2 + $0x80] sm:$0xf]
  %v504 = vld [vmem:[%s2 + $0x84] sm:$0xf]
  %v505 = vld [vmem:[%s2 + $0x88] sm:$0xf]
  %v506 = vld [vmem:[%s2 + $0x8c] sm:$0xf]
  %v507 = vld [vmem:[%s2 + $0x90] sm:$0xf]
  %v508 = vld [vmem:[%s2 + $0x94] sm:$0xf]
  %v509 = vld [vmem:[%s2 + $0x98] sm:$0xf]
  %v510 = vld [vmem:[%s2 + $0x9c] sm:$0xf]
  %v511 = vld [vmem:[%s2 + $0xa0] sm:$0xf]
  %v512 = vld [vmem:[%s2 + $0xa4] sm:$0xf]
  %v513 = vld [vmem:[%s2 + $0xa8] sm:$0xf]
  %v514 = vld [vmem:[%s2 + $0xac] sm:$0xf]
  %v515 = vld [vmem:[%s2 + $0xb0] sm:$0xf]
  %v516 = vld [vmem:[%s2 + $0xb4] sm:$0xf]
  %v517 = vld [vmem:[%s2 + $0xb8] sm:$0xf]
  %v518 = vld [vmem:[%s2 + $0xbc] sm:$0xf]
  %v567 = vunpack.c.l.b16 %v471
  %v568 = vunpack.c.l.b16 %v472
  %v569 = vunpack.c.l.b16 %v473
  %v570 = vunpack.c.l.b16 %v474
  %v571 = vunpack.c.l.b16 %v475
  %v572 = vunpack.c.l.b16 %v476
  %v573 = vunpack.c.l.b16 %v477
  %v574 = vunpack.c.l.b16 %v478
  %v575 = vunpack.c.l.b16 %v479
  %v576 = vunpack.c.l.b16 %v480
  %v577 = vunpack.c.l.b16 %v481
  %v578 = vunpack.c.l.b16 %v482
  %v579 = vunpack.c.l.b16 %v483
  %v580 = vunpack.c.l.b16 %v484
  %v581 = vunpack.c.l.b16 %v485
  %v582 = vunpack.c.l.b16 %v486
  %v583 = vunpack.c.l.b16 %v487
  %v584 = vunpack.c.l.b16 %v488
  %v585 = vunpack.c.l.b16 %v489
  %v586 = vunpack.c.l.b16 %v490
  %v587 = vunpack.c.l.b16 %v491
  %v588 = vunpack.c.l.b16 %v492
  %v589 = vunpack.c.l.b16 %v493
  %v590 = vunpack.c.l.b16 %v494
  %v591 = vunpack.c.l.b16 %v495
  %v592 = vunpack.c.l.b16 %v496
  %v593 = vunpack.c.l.b16 %v497
  %v594 = vunpack.c.l.b16 %v498
  %v595 = vunpack.c.l.b16 %v499
  %v596 = vunpack.c.l.b16 %v500
  %v597 = vunpack.c.l.b16 %v501
  %v598 = vunpack.c.l.b16 %v502
  %v599 = vunpack.c.l.b16 %v503
  %v600 = vunpack.c.l.b16 %v504
  %v601 = vunpack.c.l.b16 %v505
  %v602 = vunpack.c.l.b16 %v506
  %v603 = vunpack.c.l.b16 %v507
  %v604 = vunpack.c.l.b16 %v508
  %v605 = vunpack.c.l.b16 %v509
  %v606 = vunpack.c.l.b16 %v510
  %v607 = vunpack.c.l.b16 %v511
  %v608 = vunpack.c.l.b16 %v512
  %v609 = vunpack.c.l.b16 %v513
  %v610 = vunpack.c.l.b16 %v514
  %v611 = vunpack.c.l.b16 %v515
  %v612 = vunpack.c.l.b16 %v516
  %v613 = vunpack.c.l.b16 %v517
  %v614 = vunpack.c.l.b16 %v518
  %v615 = vpack.c.b16 %v568, %v567
  %v616 = vpack.c.b16 %v570, %v569
  %v617 = vpack.c.b16 %v572, %v571
  %v618 = vpack.c.b16 %v574, %v573
  %v619 = vpack.c.b16 %v576, %v575
  %v620 = vpack.c.b16 %v578, %v577
  %v621 = vpack.c.b16 %v580, %v579
  %v622 = vpack.c.b16 %v582, %v581
  %v623 = vpack.c.b16 %v584, %v583
  %v624 = vpack.c.b16 %v586, %v585
  %v625 = vpack.c.b16 %v588, %v587
  %v626 = vpack.c.b16 %v590, %v589
  %v627 = vpack.c.b16 %v592, %v591
  %v628 = vpack.c.b16 %v594, %v593
  %v629 = vpack.c.b16 %v596, %v595
  %v630 = vpack.c.b16 %v598, %v597
  %v631 = vpack.c.b16 %v600, %v599
  %v632 = vpack.c.b16 %v602, %v601
  %v633 = vpack.c.b16 %v604, %v603
  %v634 = vpack.c.b16 %v606, %v605
  %v635 = vpack.c.b16 %v608, %v607
  %v636 = vpack.c.b16 %v610, %v609
  %v637 = vpack.c.b16 %v612, %v611
  %v638 = vpack.c.b16 %v614, %v613
  %663 = vmatpush.bf16.msra.mxu0 %v622
  %664 = vmatpush.bf16.msra.mxu0 %v621
  %665 = vmatpush.bf16.msra.mxu0 %v620
  %666 = vmatpush.bf16.msra.mxu0 %v619
  %667 = vmatpush.bf16.msra.mxu0 %v618
  %668 = vmatpush.bf16.msra.mxu0 %v617
  %669 = vmatpush.bf16.msra.mxu0 %v616
  %670 = vmatpush.bf16.msra.mxu0 %v615
  %671 = vmatmul.bf16.gmra.mxu0 %v465
  %v672 = vpop.f32.mrf.mxu0
  %v673 = vadd.f32 0.0, %v672
  %v674 = vpop.f32.mrf.mxu0
  %v675 = vadd.f32 0.0, %v674
  %676 = vmatmul.bf16.gmra.mxu0 %v468
  %v677 = vpop.f32.mrf.mxu0
  %v678 = vadd.f32 0.0, %v677
  %v679 = vpop.f32.mrf.mxu0
  %v680 = vadd.f32 0.0, %v679
  %681 = vdwg.mxu0
  %682 = vmatpush.bf16.msra.mxu0 %v630
  %683 = vmatpush.bf16.msra.mxu0 %v629
  %684 = vmatpush.bf16.msra.mxu0 %v628
  %685 = vmatpush.bf16.msra.mxu0 %v627
  %686 = vmatpush.bf16.msra.mxu0 %v626
  %687 = vmatpush.bf16.msra.mxu0 %v625
  %688 = vmatpush.bf16.msra.mxu0 %v624
  %689 = vmatpush.bf16.msra.mxu0 %v623
  %690 = vmatmul.bf16.gmra.mxu0 %v466
  %v691 = vpop.f32.mrf.mxu0
  %v692 = vadd.f32 %v673, %v691
  %v693 = vpop.f32.mrf.mxu0
  %v694 = vadd.f32 %v675, %v693
  %695 = vmatmul.bf16.gmra.mxu0 %v469
  %v696 = vpop.f32.mrf.mxu0
  %v697 = vadd.f32 %v678, %v696
  %v698 = vpop.f32.mrf.mxu0
  %v699 = vadd.f32 %v680, %v698
  %700 = vdwg.mxu0
  %701 = vmatpush.bf16.msra.mxu0 %v638
  %702 = vmatpush.bf16.msra.mxu0 %v637
  %703 = vmatpush.bf16.msra.mxu0 %v636
  %704 = vmatpush.bf16.msra.mxu0 %v635
  %705 = vmatpush.bf16.msra.mxu0 %v634
  %706 = vmatpush.bf16.msra.mxu0 %v633
  %707 = vmatpush.bf16.msra.mxu0 %v632
  %708 = vmatpush.bf16.msra.mxu0 %v631
  %709 = vmatmul.bf16.gmra.mxu0 %v467
  %v710 = vpop.f32.mrf.mxu0
  %v711 = vadd.f32 %v692, %v710
  %v712 = vpop.f32.mrf.mxu0
  %v713 = vadd.f32 %v694, %v712
  %714 = vmatmul.bf16.gmra.mxu0 %v470
  %v715 = vpop.f32.mrf.mxu0
  %v716 = vadd.f32 %v697, %v715
  %v717 = vpop.f32.mrf.mxu0
  %v718 = vadd.f32 %v699, %v717
  %719 = vdwg.mxu0
  %v720 = vld [vmem:[%s5] sm:$0x1]
  %v721 = vld [vmem:[%s6] sm:$0x1]
  %v722 = vmul.f32 %v711, %v711
  %v723 = vmul.f32 %v713, %v713
  %v724 = vmul.f32 %v716, %v716
  %v725 = vmul.f32 %v718, %v718
  %726 = vrot.lane.b32.xlu0 %v711, 8
  %v727 = vpop.permute.xlu0 %726
  %728 = vrot.lane.b32.xlu0 %v713, 8
  %v729 = vpop.permute.xlu0 %728
  %730 = vrot.lane.b32.xlu0 %v716, 8
  %v731 = vpop.permute.xlu0 %730
  %732 = vrot.lane.b32.xlu0 %v718, 8
  %v733 = vpop.permute.xlu0 %732
  %734 = vrot.lane.b32.xlu0 %v722, 8
  %v735 = vpop.permute.xlu0 %734
  %736 = vrot.lane.b32.xlu0 %v723, 8
  %v737 = vpop.permute.xlu0 %736
  %738 = vrot.lane.b32.xlu0 %v724, 8
  %v739 = vpop.permute.xlu0 %738
  %740 = vrot.lane.b32.xlu0 %v725, 8
  %v741 = vpop.permute.xlu0 %740
  %v742 = vadd.f32 %v711, %v727
  %v743 = vadd.f32 %v713, %v729
  %v744 = vadd.f32 %v716, %v731
  %v745 = vadd.f32 %v718, %v733
  %v746 = vadd.f32 %v722, %v735
  %v747 = vadd.f32 %v723, %v737
  %v748 = vadd.f32 %v724, %v739
  %v749 = vadd.f32 %v725, %v741
  %750 = vrot.lane.b32.xlu0 %v742, 16
  %v751 = vpop.permute.xlu0 %750
  %752 = vrot.lane.b32.xlu0 %v743, 16
  %v753 = vpop.permute.xlu0 %752
  %754 = vrot.lane.b32.xlu0 %v744, 16
  %v755 = vpop.permute.xlu0 %754
  %756 = vrot.lane.b32.xlu0 %v745, 16
  %v757 = vpop.permute.xlu0 %756
  %758 = vrot.lane.b32.xlu0 %v746, 16
  %v759 = vpop.permute.xlu0 %758
  %760 = vrot.lane.b32.xlu0 %v747, 16
  %v761 = vpop.permute.xlu0 %760
  %762 = vrot.lane.b32.xlu0 %v748, 16
  %v763 = vpop.permute.xlu0 %762
  %764 = vrot.lane.b32.xlu0 %v749, 16
  %v765 = vpop.permute.xlu0 %764
  %v766 = vadd.f32 %v742, %v751
  %v767 = vadd.f32 %v743, %v753
  %v768 = vadd.f32 %v744, %v755
  %v769 = vadd.f32 %v745, %v757
  %v770 = vadd.f32 %v746, %v759
  %v771 = vadd.f32 %v747, %v761
  %v772 = vadd.f32 %v748, %v763
  %v773 = vadd.f32 %v749, %v765
  %774 = vrot.lane.b32.xlu0 %v766, 32
  %v775 = vpop.permute.xlu0 %774
  %776 = vrot.lane.b32.xlu0 %v767, 32
  %v777 = vpop.permute.xlu0 %776
  %778 = vrot.lane.b32.xlu0 %v768, 32
  %v779 = vpop.permute.xlu0 %778
  %780 = vrot.lane.b32.xlu0 %v769, 32
  %v781 = vpop.permute.xlu0 %780
  %782 = vrot.lane.b32.xlu0 %v770, 32
  %v783 = vpop.permute.xlu0 %782
  %784 = vrot.lane.b32.xlu0 %v771, 32
  %v785 = vpop.permute.xlu0 %784
  %786 = vrot.lane.b32.xlu0 %v772, 32
  %v787 = vpop.permute.xlu0 %786
  %788 = vrot.lane.b32.xlu0 %v773, 32
  %v789 = vpop.permute.xlu0 %788
  %v790 = vadd.f32 %v766, %v775
  %v791 = vadd.f32 %v767, %v777
  %v792 = vadd.f32 %v768, %v779
  %v793 = vadd.f32 %v769, %v781
  %v794 = vadd.f32 %v770, %v783
  %v795 = vadd.f32 %v771, %v785
  %v796 = vadd.f32 %v772, %v787
  %v797 = vadd.f32 %v773, %v789
  %798 = vrot.lane.b32.xlu0 %v790, 64
  %v799 = vpop.permute.xlu0 %798
  %800 = vrot.lane.b32.xlu0 %v791, 64
  %v801 = vpop.permute.xlu0 %800
  %802 = vrot.lane.b32.xlu0 %v792, 64
  %v803 = vpop.permute.xlu0 %802
  %804 = vrot.lane.b32.xlu0 %v793, 64
  %v805 = vpop.permute.xlu0 %804
  %806 = vrot.lane.b32.xlu0 %v794, 64
  %v807 = vpop.permute.xlu0 %806
  %808 = vrot.lane.b32.xlu0 %v795, 64
  %v809 = vpop.permute.xlu0 %808
  %810 = vrot.lane.b32.xlu0 %v796, 64
  %v811 = vpop.permute.xlu0 %810
  %812 = vrot.lane.b32.xlu0 %v797, 64
  %v813 = vpop.permute.xlu0 %812
  %v814 = vadd.f32 %v790, %v799
  %v815 = vadd.f32 %v791, %v801
  %v816 = vadd.f32 %v792, %v803
  %v817 = vadd.f32 %v793, %v805
  %v818 = vadd.f32 %v794, %v807
  %v819 = vadd.f32 %v795, %v809
  %v820 = vadd.f32 %v796, %v811
  %v821 = vadd.f32 %v797, %v813
  %v822 = vadd.f32 %v814, %v815
  %v823 = vadd.f32 %v822, %v816
  %v824 = vadd.f32 %v823, %v817
  %v825 = vrot.slane %v824, 4
  %v826 = vadd.f32 %v824, %v825
  %v827 = vrot.slane %v826, 2
  %v828 = vadd.f32 %v826, %v827
  %v829 = vrot.slane %v828, 1
  %v830 = vadd.f32 %v828, %v829
  %v831 = vmul.f32 %v830, 0.001953125
  %v832 = vadd.f32 %v818, %v819
  %v833 = vadd.f32 %v832, %v820
  %v834 = vadd.f32 %v833, %v821
  %v835 = vrot.slane %v834, 4
  %v836 = vadd.f32 %v834, %v835
  %v837 = vrot.slane %v836, 2
  %v838 = vadd.f32 %v836, %v837
  %v839 = vrot.slane %v838, 1
  %v840 = vadd.f32 %v838, %v839
  %v841 = vmul.f32 %v840, 0.001953125
  %v842 = vmul.f32 %v831, %v831
  %v843 = vsub.f32 %v841, %v842
  %v844 = vadd.f32 %v843, 1e-05
  %v845 = vrsqrt.pop %v844
  %v846 = vmul.f32 %v845, %v844
  %v847 = vmul.f32 %v846, %v845
  %v848 = vmul.f32 0.5, %v847
  %v849 = vsub.f32 1.5, %v848
  %v850 = vmul.f32 %v845, %v849
  %vm851 = vweird.f32 %v844
  %vm852 = vweird.f32 %v845
  %vm853 = vmor %vm851, %vm852
  %v854 = vsel %vm853, %v845, %v850
  %v855 = vmul.f32 %v720, %v854
  %v856 = vmul.f32 %v831, %v855
  %v857 = vsub.f32 %v721, %v856
  %v859 = vperm.slane %v855, 0
  %v861 = vmul.f32 %v711, %v859
  %v862 = vmul.f32 %v713, %v859
  %v863 = vmul.f32 %v716, %v859
  %v864 = vmul.f32 %v718, %v859
  %v866 = vperm.slane %v857, 0
  %v868 = vadd.f32 %v861, %v866
  %v869 = vadd.f32 %v862, %v866
  %v870 = vadd.f32 %v863, %v866
  %v871 = vadd.f32 %v864, %v866
  %v872 = vmax.f32 %v868, 0.0
  %v873 = vmax.f32 %v869, 0.0
  %v874 = vmax.f32 %v870, 0.0
  %v875 = vmax.f32 %v871, 0.0
  %876 = vst [vmem:[%s7] sm:$0xff] %v872
  %877 = vst [vmem:[%s7 + $0x8] sm:$0xff] %v873
  %878 = vst [vmem:[%s7 + $0x10] sm:$0xff] %v874
  %879 = vst [vmem:[%s7 + $0x18] sm:$0xff] %v875
  // Predicated region
  $region30: #{double_conv.1} parent=0 // pred_check
    _
  $region31: #{double_conv.1} parent=0 // pred_check_branch
    %881 = sbr.rel (0) target = $region33
  $region32: #{double_conv.1} parent=0 // pred_region
    _
  $region33: #{double_conv.1} parent=0 // pred_fallthru
    _
  // Predicated region
  $region34: #{double_conv.1} parent=0 // pred_check
    _
  $region35: #{double_conv.1} parent=0 // pred_check_branch
    %883 = sbr.rel (0) target = $region37
  $region36: #{double_conv.1} parent=0 // pred_region
    _
  $region37: #{double_conv.1} parent=0 // pred_fallthru
    _

</llo_original>
